<compile_context>
chip_gen: v7x
topology: tpu7x:2x2x1
jax: 0.10.0
libtpu: 0.0.40
codegen_flags: <defaults>
</compile_context>

<pallas_src>
import functools
import math

import jax
import jax.numpy as jnp
from jax.experimental import pallas as pl
from jax.experimental.pallas import tpu as pltpu


_MASK_VALUE = -1e30


# ----------------------------------------------------------------------------
# Hardware-aware helpers
# ----------------------------------------------------------------------------
@functools.lru_cache(maxsize=1)
def _vmem_cap_bytes():
    """Physical VMEM per core; falls back to the v7x minimum (64 MiB)."""
    try:
        info = pltpu.get_tpu_info()
        cap = getattr(info, "vmem_capacity_bytes", None)
        if cap:
            return int(cap)
    except Exception:
        pass
    return 64 << 20


def _vmem_limit(need_bytes):
    """Scoped VMEM limit: requested working set + margin, <= 3/4 of physical."""
    ceiling = (_vmem_cap_bytes() * 3) // 4          # ~96 MiB v5e/v6e, ~48 MiB v7x
    return int(min(max(need_bytes + (8 << 20), 32 << 20), ceiling))


def _pick_tile(dim, candidates):
    """Largest candidate that divides dim, else the full dim (no padding pass)."""
    for c in candidates:
        if c <= dim and dim % c == 0:
            return c
    return dim


# ----------------------------------------------------------------------------
# Tiled matmul kernel (used for fused qkv projection and o_proj)
# ----------------------------------------------------------------------------
def _matmul_kernel(a_ref, b_ref, o_ref, acc_ref):
    @pl.when(pl.program_id(2) == 0)
    def _():
        acc_ref[...] = jnp.zeros_like(acc_ref)

    acc_ref[...] += jnp.dot(a_ref[...], b_ref[...],
                            preferred_element_type=jnp.float32)

    # Cast + store only once, on the last contraction step.
    @pl.when(pl.program_id(2) == pl.num_programs(2) - 1)
    def _():
        o_ref[...] = acc_ref[...].astype(o_ref.dtype)


def matmul(a, b, *, out_dtype=None):
    M, K = a.shape
    K2, N = b.shape
    assert K == K2
    out_dtype = out_dtype or a.dtype

    tm = _pick_tile(M, (512, 256, 128, 64, 32, 16, 8))
    tn = _pick_tile(N, (512, 256, 128))
    tk = _pick_tile(K, (512, 256, 128))
    grid = (M // tm, N // tn, K // tk)

    a_sz = jnp.dtype(a.dtype).itemsize
    b_sz = jnp.dtype(b.dtype).itemsize
    o_sz = jnp.dtype(out_dtype).itemsize
    need = 2 * (tm * tk * a_sz + tk * tn * b_sz + tm * tn * o_sz) + tm * tn * 4

    return pl.pallas_call(
        _matmul_kernel,
        out_shape=jax.ShapeDtypeStruct((M, N), out_dtype),
        grid_spec=pltpu.PrefetchScalarGridSpec(
            num_scalar_prefetch=0,
            grid=grid,
            in_specs=[
                pl.BlockSpec((tm, tk), lambda i, j, k: (i, k)),
                pl.BlockSpec((tk, tn), lambda i, j, k: (k, j)),
            ],
            out_specs=pl.BlockSpec((tm, tn), lambda i, j, k: (i, j)),
            scratch_shapes=[pltpu.VMEM((tm, tn), jnp.float32)],
        ),
        compiler_params=pltpu.CompilerParams(
            dimension_semantics=("parallel", "parallel", "arbitrary"),
            vmem_limit_bytes=_vmem_limit(need),
        ),
    )(a, b)


# ----------------------------------------------------------------------------
# GQA-aware causal flash-attention kernel
# ----------------------------------------------------------------------------
def _flash_attn_kernel(q_ref, k_ref, v_ref, o_ref, m_sc, l_sc, acc_sc,
                       *, scale, tq, tk, n_group):
    qi = pl.program_id(1)
    ki = pl.program_id(2)

    d = q_ref.shape[-1]
    rows = n_group * tq

    q_first = qi * tq
    q_last = q_first + tq - 1
    k_first = ki * tk
    k_last = k_first + tk - 1

    @pl.when(ki == 0)
    def _init():
        m_sc[...] = jnp.full_like(m_sc, _MASK_VALUE)
        l_sc[...] = jnp.zeros_like(l_sc)
        acc_sc[...] = jnp.zeros_like(acc_sc)

    def _step(apply_mask):
        # q covers all n_group query heads of this KV group, stacked along rows.
        q = q_ref[...].reshape(rows, d)          # native dtype -> MXU
        k = k_ref[0]                             # (tk, D), native dtype
        v = v_ref[0]                             # (tk, D), native dtype

        s = jax.lax.dot_general(
            q, k, (((1,), (1,)), ((), ())),
            preferred_element_type=jnp.float32) * scale      # (rows, tk) f32

        if apply_mask:
            r = jax.lax.broadcasted_iota(jnp.int32, (rows, tk), 0)
            row = q_first + (r % tq)
            col = k_first + jax.lax.broadcasted_iota(jnp.int32, (rows, tk), 1)
            s = jnp.where(row >= col, s, _MASK_VALUE)

        m_prev = m_sc[...]
        m_new = jnp.maximum(m_prev, s.max(axis=-1, keepdims=True))   # (rows, 1)
        alpha = jnp.exp(m_prev - m_new)
        p = jnp.exp(s - m_new)
        l_sc[...] = alpha * l_sc[...] + p.sum(axis=-1, keepdims=True)
        acc_sc[...] = alpha * acc_sc[...] + jnp.dot(
            p.astype(v.dtype), v, preferred_element_type=jnp.float32)
        m_sc[...] = m_new

    # Fully-visible kv block (strictly below the causal diagonal): no mask work.
    @pl.when(k_last <= q_first)
    def _full():
        _step(apply_mask=False)

    # Block straddling the diagonal: apply the causal mask.
    @pl.when(jnp.logical_and(k_first <= q_last, k_last > q_first))
    def _partial():
        _step(apply_mask=True)

    # Finalize at the last kv block that intersects the causal region.
    @pl.when(ki == q_last // tk)
    def _finalize():
        inv_l = pl.reciprocal(l_sc[...], approx=True)
        o_ref[...] = (acc_sc[...] * inv_l).reshape(
            n_group, tq, d).astype(o_ref.dtype)


def flash_attention(q, k, v, *, num_q_heads, num_kv_heads, sm_scale):
    """q: (B*Hq, S, D); k, v: (B*Hkv, S, D) -> (B*Hq, S, D), causal GQA."""
    BHq, S, D = q.shape
    BHkv = k.shape[0]
    n_group = num_q_heads // num_kv_heads
    assert BHq == BHkv * n_group

    big_vmem = _vmem_cap_bytes() >= (96 << 20)          # v5e/v6e: 128 MiB
    row_budget = 1024 if big_vmem else 512               # q rows resident per step
    tq_cands = tuple(c for c in (1024, 512, 256, 128, 64)
                     if c * n_group <= row_budget)
    tq = _pick_tile(S, tq_cands or (128,))
    tk = _pick_tile(S, (512, 256, 128) if big_vmem else (256, 128))
    rows = n_group * tq
    grid = (BHkv, S // tq, S // tk)

    def q_index(bg, qi, ki):
        # block size along heads axis is n_group, so block index bg lands at
        # element offset bg * n_group = b*Hq + g*n_group (heads of this group).
        return (bg, qi, 0)

    def kv_index(bg, qi, ki):
        # Clamp above-diagonal kv blocks to the diagonal block so the pipeline
        # sees a repeated block index and elides the HBM refetch.
        last = (qi * tq + tq - 1) // tk
        return (bg, jnp.minimum(ki, last), 0)

    kernel = functools.partial(_flash_attn_kernel, scale=sm_scale,
                               tq=tq, tk=tk, n_group=n_group)

    dsz = jnp.dtype(q.dtype).itemsize
    need = (2 * (2 * rows * D + 2 * tk * D) * dsz     # double-buffered q/o + k/v blocks
            + rows * (D + 2) * 4                      # f32 scratch accumulators
            + 2 * rows * tk * 4)                      # s / p intermediates

    return pl.pallas_call(
        kernel,
        out_shape=jax.ShapeDtypeStruct((BHq, S, D), q.dtype),
        grid_spec=pltpu.PrefetchScalarGridSpec(
            num_scalar_prefetch=0,
            grid=grid,
            in_specs=[
                pl.BlockSpec((n_group, tq, D), q_index),
                pl.BlockSpec((1, tk, D), kv_index),
                pl.BlockSpec((1, tk, D), kv_index),
            ],
            out_specs=pl.BlockSpec((n_group, tq, D), q_index),
            scratch_shapes=[
                pltpu.VMEM((rows, 1), jnp.float32),   # running max
                pltpu.VMEM((rows, 1), jnp.float32),   # running denom
                pltpu.VMEM((rows, D), jnp.float32),   # output accumulator
            ],
        ),
        compiler_params=pltpu.CompilerParams(
            dimension_semantics=("parallel", "parallel", "arbitrary"),
            vmem_limit_bytes=_vmem_limit(need),
        ),
    )(q, k, v)


# ----------------------------------------------------------------------------
# RoPE (matches RotaryEmbedding in the PyTorch module)
# ----------------------------------------------------------------------------
def rope_cos_sin(seq_len, dim):
    inv_freq = 1.0 / (10000.0 ** (jnp.arange(0, dim, 2, dtype=jnp.float32) / dim))
    t = jnp.arange(seq_len, dtype=jnp.float32)[:, None]
    freqs = t * inv_freq[None, :]
    freqs = jnp.concatenate([freqs, freqs], axis=-1)     # (S, dim)
    return jnp.cos(freqs), jnp.sin(freqs)


def apply_rope(x, cos, sin):
    # x: (B, S, H, D); cos/sin: (S, D)
    half = x.shape[-1] // 2
    x1, x2 = x[..., :half], x[..., half:]
    rot = jnp.concatenate([-x2, x1], axis=-1)
    return x * cos[None, :, None, :] + rot * sin[None, :, None, :]


# ----------------------------------------------------------------------------
# Full Attention forward (fused qkv proj + RoPE + GQA causal attention + o_proj)
# ----------------------------------------------------------------------------
def attention_forward(rep, wq, wk, wv, wo, *, num_heads, num_kv_heads, head_dim):
    B, S, hidden = rep.shape
    assert head_dim % 2 == 0

    q_dim = num_heads * head_dim
    kv_dim = num_kv_heads * head_dim

    # Fused q/k/v projection: one pass over the activations, one pallas_call.
    wqkv = jnp.concatenate([wq, wk, wv], axis=1)          # (hidden, q+2*kv)
    x2d = rep.reshape(B * S, hidden)
    qkv = matmul(x2d, wqkv)

    q = qkv[:, :q_dim].reshape(B, S, num_heads, head_dim)
    k = qkv[:, q_dim:q_dim + kv_dim].reshape(B, S, num_kv_heads, head_dim)
    v = qkv[:, q_dim + kv_dim:].reshape(B, S, num_kv_heads, head_dim)

    cos, sin = rope_cos_sin(S, head_dim)
    q = apply_rope(q, cos, sin)
    k = apply_rope(k, cos, sin)

    # (B, S, H, D) -> (B*H, S, D); heads of a KV group stay contiguous so the
    # flash kernel can serve the whole group from one K/V fetch.
    qf = q.transpose(0, 2, 1, 3).reshape(B * num_heads, S, head_dim)
    kf = k.transpose(0, 2, 1, 3).reshape(B * num_kv_heads, S, head_dim)
    vf = v.transpose(0, 2, 1, 3).reshape(B * num_kv_heads, S, head_dim)

    of = flash_attention(qf, kf, vf,
                         num_q_heads=num_heads,
                         num_kv_heads=num_kv_heads,
                         sm_scale=1.0 / math.sqrt(head_dim))

    out = of.reshape(B, num_heads, S, head_dim).transpose(0, 2, 1, 3)
    out = out.reshape(B * S, num_heads * head_dim)
    out = matmul(out, wo)                                  # o_proj
    return out.reshape(B, S, hidden)


# ----------------------------------------------------------------------------
# Pure-JAX reference (mirrors the PyTorch forward, eval mode, no kv cache)
# ----------------------------------------------------------------------------
def attention_reference(rep, wq, wk, wv, wo, *, num_heads, num_kv_heads, head_dim):
    B, S, hidden = rep.shape
    n_group = num_heads // num_kv_heads

    q = (rep.reshape(B * S, hidden) @ wq).reshape(B, S, num_heads, head_dim)
    k = (rep.reshape(B * S, hidden) @ wk).reshape(B, S, num_kv_heads, head_dim)
    v = (rep.reshape(B * S, hidden) @ wv).reshape(B, S, num_kv_heads, head_dim)

    cos, sin = rope_cos_sin(S, head_dim)
    q = apply_rope(q, cos, sin)
    k = apply_rope(k, cos, sin)

    k = jnp.repeat(k, n_group, axis=2)
    v = jnp.repeat(v, n_group, axis=2)

    q = q.transpose(0, 2, 1, 3)
    k = k.transpose(0, 2, 1, 3)
    v = v.transpose(0, 2, 1, 3)

    scores = jnp.einsum("bhqd,bhkd->bhqk", q, k) / math.sqrt(head_dim)
    causal = jnp.tril(jnp.ones((S, S), dtype=bool))
    scores = jnp.where(causal[None, None], scores, -jnp.inf)
    probs = jax.nn.softmax(scores, axis=-1)
    out = jnp.einsum("bhqk,bhkd->bhqd", probs, v)
    out = out.transpose(0, 2, 1, 3).reshape(B * S, num_heads * head_dim)
    return (out @ wo).reshape(B, S, hidden)


# ----------------------------------------------------------------------------
# Self-test
# ----------------------------------------------------------------------------
if __name__ == "__main__":
    key = jax.random.PRNGKey(0)
    batch, seq, hidden = 2, 8, 32
    num_heads, num_kv_heads = 4, 2
    head_dim = hidden // num_heads            # 8

    k1, k2, k3, k4, k5 = jax.random.split(key, 5)
    rep = jax.random.normal(k1, (batch, seq, hidden), dtype=jnp.float32)
    w_scale = 1.0 / math.sqrt(hidden)
    wq = jax.random.normal(k2, (hidden, num_heads * head_dim), jnp.float32) * w_scale
    wk = jax.random.normal(k3, (hidden, num_kv_heads * head_dim), jnp.float32) * w_scale
    wv = jax.random.normal(k4, (hidden, num_kv_heads * head_dim), jnp.float32) * w_scale
    wo = jax.random.normal(k5, (num_heads * head_dim, hidden), jnp.float32) * w_scale

    out = attention_forward(rep, wq, wk, wv, wo,
                            num_heads=num_heads,
                            num_kv_heads=num_kv_heads,
                            head_dim=head_dim)
    out = jax.block_until_ready(out)

    ref = attention_reference(rep, wq, wk, wv, wo,
                              num_heads=num_heads,
                              num_kv_heads=num_kv_heads,
                              head_dim=head_dim)

    assert out.shape == (batch, seq, hidden)
    assert out.dtype == rep.dtype
    # Tolerance accounts for the approximate (EUP) reciprocal in the finalize.
    max_err = float(jnp.max(jnp.abs(out - ref)))
    assert jnp.allclose(out, ref, atol=5e-3, rtol=5e-3), f"max abs err {max_err}"

    print("KERNEL_OK")
</pallas_src>

<mosaic_0001>
module attributes {stable_mosaic.version = 11 : i64} {
  func.func @_matmul_kernel(%arg0: i32, %arg1: i32, %arg2: i32, %arg3: memref<16x32xf32, #tpu.memory_space<vmem>>, %arg4: memref<32x64xf32, #tpu.memory_space<vmem>>, %arg5: memref<16x64xf32, #tpu.memory_space<vmem>>, %arg6: memref<16x64xf32, #tpu.memory_space<vmem>>) attributes {dimension_semantics = [#tpu.dimension_semantics<parallel>, #tpu.dimension_semantics<parallel>, #tpu.dimension_semantics<arbitrary>], iteration_bounds = array<i64: 1, 1, 1>, scalar_prefetch = 0 : i64, scratch_operands = 1 : i64, tpu.core_type = #tpu.core_type<tc>, window_params = [{transform_indices = @transform_0, window_bounds = array<i64: 16, 32>}, {transform_indices = @transform_1, window_bounds = array<i64: 32, 64>}, {transform_indices = @transform_2, window_bounds = array<i64: 16, 64>}]} {
    %c0_i32 = arith.constant 0 : i32
    %0 = arith.cmpi eq, %arg2, %c0_i32 : i32
    %1 = arith.extui %0 : i1 to i32
    %c0_i32_0 = arith.constant 0 : i32
    %2 = arith.cmpi ne, %1, %c0_i32_0 : i32
    scf.if %2 {
      %cst_10 = arith.constant 0.000000e+00 : f32
      %12 = vector.broadcast %cst_10 : f32 to vector<16x64xf32>
      %c0_11 = arith.constant 0 : index
      %c0_12 = arith.constant 0 : index
      %13 = vector.load %arg6[%c0_11, %c0_12] : memref<16x64xf32, #tpu.memory_space<vmem>>, vector<16x64xf32>
      tpu.vector_store %arg6[%c0_11, %c0_12], %12 {strides = array<i32>} : memref<16x64xf32, #tpu.memory_space<vmem>>, vector<16x64xf32>,
    } else {
    }
    %c0 = arith.constant 0 : index
    %c0_1 = arith.constant 0 : index
    %3 = vector.load %arg6[%c0, %c0_1] : memref<16x64xf32, #tpu.memory_space<vmem>>, vector<16x64xf32>
    %c0_2 = arith.constant 0 : index
    %c0_3 = arith.constant 0 : index
    %4 = vector.load %arg3[%c0_2, %c0_3] : memref<16x32xf32, #tpu.memory_space<vmem>>, vector<16x32xf32>
    %c0_4 = arith.constant 0 : index
    %c0_5 = arith.constant 0 : index
    %5 = vector.load %arg4[%c0_4, %c0_5] : memref<32x64xf32, #tpu.memory_space<vmem>>, vector<32x64xf32>
    %cst = arith.constant dense<0.000000e+00> : vector<16x64xf32>
    %6 = tpu.matmul %4, %5, %cst {dimension_numbers = #tpu.dot_dimension_numbers<[1], [0], [0], [1], [0, 0, 1, 1], [], []>} : vector<16x32xf32>, vector<32x64xf32>, vector<16x64xf32> -> vector<16x64xf32>
    %7 = arith.addf %3, %6 : vector<16x64xf32>
    %c0_6 = arith.constant 0 : index
    %c0_7 = arith.constant 0 : index
    %8 = vector.load %arg6[%c0_6, %c0_7] : memref<16x64xf32, #tpu.memory_space<vmem>>, vector<16x64xf32>
    tpu.vector_store %arg6[%c0_6, %c0_7], %7 {strides = array<i32>} : memref<16x64xf32, #tpu.memory_space<vmem>>, vector<16x64xf32>,
    %c0_i32_8 = arith.constant 0 : i32
    %9 = arith.cmpi eq, %arg2, %c0_i32_8 : i32
    %10 = arith.extui %9 : i1 to i32
    %c0_i32_9 = arith.constant 0 : i32
    %11 = arith.cmpi ne, %10, %c0_i32_9 : i32
    scf.if %11 {
      %c0_10 = arith.constant 0 : index
      %c0_11 = arith.constant 0 : index
      %12 = vector.load %arg6[%c0_10, %c0_11] : memref<16x64xf32, #tpu.memory_space<vmem>>, vector<16x64xf32>
      %c0_12 = arith.constant 0 : index
      %c0_13 = arith.constant 0 : index
      %13 = vector.load %arg5[%c0_12, %c0_13] : memref<16x64xf32, #tpu.memory_space<vmem>>, vector<16x64xf32>
      tpu.vector_store %arg5[%c0_12, %c0_13], %12 {strides = array<i32>} : memref<16x64xf32, #tpu.memory_space<vmem>>, vector<16x64xf32>,
    } else {
    }
    return
  }
  func.func @transform_0(%arg0: i32, %arg1: i32, %arg2: i32) -> (i32, i32) {
    %c0_i32 = arith.constant 0 : i32
    return %arg0, %arg2 : i32, i32
  }
  func.func @transform_1(%arg0: i32, %arg1: i32, %arg2: i32) -> (i32, i32) {
    %c0_i32 = arith.constant 0 : i32
    return %arg2, %arg1 : i32, i32
  }
  func.func @transform_2(%arg0: i32, %arg1: i32, %arg2: i32) -> (i32, i32) {
    %c0_i32 = arith.constant 0 : i32
    return %arg0, %arg1 : i32, i32
  }
}

</mosaic_0001>

<llo_original>
// kernel: tpu_custom_call.1
$region0: #{tpu_custom_call.1}
  #allocation0 [shape = 'u32[]', space=smem, size = 0x4, offset = 0x4, fixed_abs, tag = 'smem constant byte address 0x4 - core index']
  #allocation1 [shape = 'u32[144,128]{1,0:T(1,128)}', space=vmem, size = 0x12000, scoped, tag = 'internal scratch']
  #allocation2 [shape = 'f32[16,64]{1,0:T(8,128)}', space=vmem, size = 0x2000, scoped, tag = 'scratch operand']
  %s0 = inlined_call_operand.hbm [shape: f32[16,32], index: 0, kind: input, shape index: {}]
  %s1 = inlined_call_operand.hbm [shape: f32[32,64], index: 1, kind: input, shape index: {}]
  %s2 = inlined_call_operand.hbm [shape: f32[16,64], index: 2, kind: output, shape index: {}]
  %s3 = sld [smem:[#allocation0]]
  $region34: #{tpu_custom_call.1} parent=0
    _
  %s5 = ssub.s32 1, %s3
  %s6 = scalar_select 0, %s5, %s3
  $region1: #{tpu_custom_call.1} parent=0
    #allocation3 [shape = 'u8[8192]{0}', space=vmem, size = 0x2000, scoped, tag = 'input window, operand 0, single buffered']
    #allocation4 [shape = 's32[1]{0}', space=sflag, size = 0x4, scoped, tag = 'scoped memory for tpu_custom_call.1']
    #allocation5 [shape = 's32[1]{0}', space=sflag, size = 0x4, scoped, tag = 'scoped memory for tpu_custom_call.1']
    #allocation6 [shape = 'u8[16384]{0}', space=vmem, size = 0x4000, scoped, tag = 'input window, operand 1, single buffered']
    #allocation7 [shape = 's32[1]{0}', space=sflag, size = 0x4, scoped, tag = 'scoped memory for tpu_custom_call.1']
    #allocation8 [shape = 'u8[8192]{0}', space=vmem, size = 0x2000, scoped, tag = 'output window, operand 0, single buffered']
    %7 = vsyncpa [#allocation4], 0
    %8 = vsyncpa [#allocation7], 0
    %9 = vsyncpa [#allocation5], 0
    // Predicated region
    $region2: #{tpu_custom_call.1} parent=1 // pred_check
      _
    $region3: #{tpu_custom_call.1} parent=1 // pred_check_branch
      %11 = sbr.rel (0) target = $region5
    $region4: #{tpu_custom_call.1} parent=1 // pred_region
      %s13 = ssub.s32 256, 256
      %14 = vsyncadd [#allocation4], %s13
      %s15 = sshll.u32 [#allocation3], 4
      %s16 = int_to_ptr.vmem [resolvable:$true] %s15
      %21 = dma.hbm_to_vmem [thread:$0]  %s0, 256, %s16, [#allocation4], 128, 128, 8
    $region5: #{tpu_custom_call.1} parent=1 // pred_fallthru
      _
    // Predicated region
    $region6: #{tpu_custom_call.1} parent=1 // pred_check
      _
    $region7: #{tpu_custom_call.1} parent=1 // pred_check_branch
      %23 = sbr.rel (0) target = $region9
    $region8: #{tpu_custom_call.1} parent=1 // pred_region
      %s25 = ssub.s32 512, 512
      %26 = vsyncadd [#allocation7], %s25
      %s27 = sshll.u32 [#allocation6], 4
      %s28 = int_to_ptr.vmem [resolvable:$true] %s27
      %33 = dma.hbm_to_vmem [thread:$0]  %s1, 512, %s28, [#allocation7], 128, 128, 8
    $region9: #{tpu_custom_call.1} parent=1 // pred_fallthru
      _
    // Predicated region
    $region10: #{tpu_custom_call.1} parent=1 // pred_check
      _
    $region11: #{tpu_custom_call.1} parent=1 // pred_check_branch
      %35 = sbr.rel (0) target = $region13
    $region12: #{tpu_custom_call.1} parent=1 // pred_region
      %36 = dma.done [#allocation4], 256
    $region13: #{tpu_custom_call.1} parent=1 // pred_fallthru
      _
    // Predicated region
    $region14: #{tpu_custom_call.1} parent=1 // pred_check
      _
    $region15: #{tpu_custom_call.1} parent=1 // pred_check_branch
      %38 = sbr.rel (0) target = $region17
    $region16: #{tpu_custom_call.1} parent=1 // pred_region
      %39 = dma.done [#allocation7], 512
    $region17: #{tpu_custom_call.1} parent=1 // pred_fallthru
      _
    %p40 = scmp.eq.s32.totalorder 0, 0
    // Predicated region
    $region18: #{tpu_custom_call.1} parent=1 // pred_check
      %p41 = pneg %p40
    $region19: #{tpu_custom_call.1} parent=1 // pred_check_branch
      %43 = sbr.rel (%p41) target = $region21
    $region20: #{tpu_custom_call.1} parent=1 // pred_region
      %vm44 = vcmask 523264
      %45 = vst.msk [vmem:[#allocation2] sm:$0xff] %vm44, 0.0
      %46 = vst.msk [vmem:[#allocation2 + $0x8] sm:$0xff] %vm44, 0.0
    $region21: #{tpu_custom_call.1} parent=1 // pred_fallthru
      _
    %v47 = vld [vmem:[#allocation2] sm:$0xff]
    %v48 = vld [vmem:[#allocation2 + $0x8] sm:$0xff]
    %v49 = vld [vmem:[#allocation3] sm:$0xff]
    %v50 = vld [vmem:[#allocation3 + $0x8] sm:$0xff]
    %v51 = vld [vmem:[#allocation6] sm:$0xff]
    %v52 = vld [vmem:[#allocation6 + $0x8] sm:$0xff]
    %v53 = vld [vmem:[#allocation6 + $0x10] sm:$0xff]
    %v54 = vld [vmem:[#allocation6 + $0x18] sm:$0xff]
    %vm55 = vcmask 261120
    %v57 = vsel %vm55, %v49, 0
    %v60 = vsel %vm55, %v50, 0
    %62 = vmatprep.subr.mxu0 0.0
    %63 = vmatpush1.msra.mxu0 %v51
    %64 = vmatprep.subr.mxu0 0.0
    %65 = vmatpush1.msra.mxu0 %v52
    %66 = vmatprep.subr.mxu0 0.0
    %67 = vmatpush1.msra.mxu0 %v53
    %68 = vmatprep.subr.mxu0 0.0
    %69 = vmatpush1.msra.mxu0 %v54
    %70 = vmatprep.subr.mxu0 0.0
    %71 = vmatpush1.msra.mxu0 0.0
    %72 = vmatprep.subr.mxu0 0.0
    %73 = vmatpush1.msra.mxu0 0.0
    %74 = vmatprep.subr.mxu0 0.0
    %75 = vmatpush1.msra.mxu0 0.0
    %76 = vmatprep.subr.mxu0 0.0
    %77 = vmatpush1.msra.mxu0 0.0
    %78 = vmatprep.subr.mxu0 0.0
    %79 = vmatpush1.msra.mxu0 0.0
    %80 = vmatprep.subr.mxu0 0.0
    %81 = vmatpush1.msra.mxu0 0.0
    %82 = vmatprep.subr.mxu0 0.0
    %83 = vmatpush1.msra.mxu0 0.0
    %84 = vmatprep.subr.mxu0 0.0
    %85 = vmatpush1.msra.mxu0 0.0
    %86 = vmatprep.subr.mxu0 0.0
    %87 = vmatpush1.msra.mxu0 0.0
    %88 = vmatprep.subr.mxu0 0.0
    %89 = vmatpush1.msra.mxu0 0.0
    %90 = vmatprep.subr.mxu0 0.0
    %91 = vmatpush1.msra.mxu0 0.0
    %92 = vmatprep.subr.mxu0 0.0
    %93 = vmatpush1.msra.mxu0 0.0
    %94 = vmatprep.subr.mxu0 0.0
    %95 = vmatpush1.msra.mxu0 0.0
    %96 = vmatprep.subr.mxu0 0.0
    %97 = vmatpush1.msra.mxu0 0.0
    %98 = vmatprep.subr.mxu0 0.0
    %99 = vmatpush1.msra.mxu0 0.0
    %100 = vmatprep.subr.mxu0 0.0
    %101 = vmatpush1.msra.mxu0 0.0
    %102 = vmatprep.subr.mxu0 0.0
    %103 = vmatpush1.msra.mxu0 0.0
    %104 = vmatprep.subr.mxu0 0.0
    %105 = vmatpush1.msra.mxu0 0.0
    %106 = vmatprep.subr.mxu0 0.0
    %107 = vmatpush1.msra.mxu0 0.0
    %108 = vmatprep.subr.mxu0 0.0
    %109 = vmatpush1.msra.mxu0 0.0
    %110 = vmatprep.subr.mxu0 0.0
    %111 = vmatpush1.msra.mxu0 0.0
    %112 = vmatprep.subr.mxu0 0.0
    %113 = vmatpush1.msra.mxu0 0.0
    %114 = vmatprep.subr.mxu0 0.0
    %115 = vmatpush1.msra.mxu0 0.0
    %116 = vmatprep.subr.mxu0 0.0
    %117 = vmatpush1.msra.mxu0 0.0
    %118 = vmatprep.subr.mxu0 0.0
    %119 = vmatpush1.msra.mxu0 0.0
    %120 = vmatprep.subr.mxu0 0.0
    %121 = vmatpush1.msra.mxu0 0.0
    %122 = vmatprep.subr.mxu0 0.0
    %123 = vmatpush1.msra.mxu0 0.0
    %124 = vmatprep.subr.mxu0 0.0
    %125 = vmatpush1.msra.mxu0 0.0
    %126 = vmatprep.mubr.f32.mxu0 0.0
    %127 = vmatmul.mubr.f32.gmra.mrb[0].mxu0 %v57
    %v128 = vpop.f32.mrb[0].mxu0
    %v129 = vadd.f32 0.0, %v128
    %v130 = vpop.f32.mrb[0].mxu0
    %131 = vmatprep.mubr.f32.mxu0 0.0
    %132 = vmatmul.mubr.f32.gmra.mrb[0].mxu0 %v60
    %v133 = vpop.f32.mrb[0].mxu0
    %v134 = vadd.f32 0.0, %v133
    %v135 = vpop.f32.mrb[0].mxu0
    %136 = vdwg.mxu0
    %v137 = vadd.f32 %v47, %v129
    %v138 = vadd.f32 %v48, %v134
    %vm139 = vcmask 523264
    %140 = vst.msk [vmem:[#allocation2] sm:$0xff] %vm139, %v137
    %141 = vst.msk [vmem:[#allocation2 + $0x8] sm:$0xff] %vm139, %v138
    // Predicated region
    $region22: #{tpu_custom_call.1} parent=1 // pred_check
      %p142 = pneg %p40
    $region23: #{tpu_custom_call.1} parent=1 // pred_check_branch
      %144 = sbr.rel (%p142) target = $region25
    $region24: #{tpu_custom_call.1} parent=1 // pred_region
      %v145 = vld [vmem:[#allocation2] sm:$0xff]
      %v146 = vld [vmem:[#allocation2 + $0x8] sm:$0xff]
      %147 = vst.msk [vmem:[#allocation8] sm:$0xff] %vm139, %v145
      %148 = vst.msk [vmem:[#allocation8 + $0x8] sm:$0xff] %vm139, %v146
    $region25: #{tpu_custom_call.1} parent=1 // pred_fallthru
      _
    // Predicated region
    $region26: #{tpu_custom_call.1} parent=1 // pred_check
      _
    $region27: #{tpu_custom_call.1} parent=1 // pred_check_branch
      %150 = sbr.rel (0) target = $region29
    $region28: #{tpu_custom_call.1} parent=1 // pred_region
      %s152 = ssub.s32 256, 256
      %153 = vsyncadd [#allocation5], %s152
      %s154 = sshll.u32 [#allocation8], 4
      %s155 = int_to_ptr.vmem [resolvable:$true] %s154
      %160 = dma.vmem_to_hbm [thread:$0]  %s155, 256, %s2, [#allocation5], 128, 128, 8
    $region29: #{tpu_custom_call.1} parent=1 // pred_fallthru
      _
    // Predicated region
    $region30: #{tpu_custom_call.1} parent=1 // pred_check
      _
    $region31: #{tpu_custom_call.1} parent=1 // pred_check_branch
      %162 = sbr.rel (0) target = $region33
    $region32: #{tpu_custom_call.1} parent=1 // pred_region
      %163 = dma.done [#allocation5], 256
    $region33: #{tpu_custom_call.1} parent=1 // pred_fallthru
      _
    %164 = vsyncpa [#allocation4], 1
    %165 = vsyncpa [#allocation7], 1
    %166 = vsyncpa [#allocation5], 1

</llo_original>
